<compile_context>
chip_gen: v5e
topology: v5e:2x2
jax: 0.10.0
libtpu: 0.0.40
codegen_flags: <defaults>
</compile_context>

<pallas_src>
import functools

import jax
import jax.numpy as jnp
from jax.experimental import pallas as pl
from jax.experimental.pallas import tpu as pltpu


def _rnn_classifier_kernel(tok_ref, p_ref, whh_ref, wlin_ref, blin_ref, out_ref):
    # tok_ref  : (B, S)       int32  token ids (PyTorch batch-first layout)
    # p_ref    : (V_pad, D)   f32    emb @ Wih^T + (b_ih + b_hh), rows >= V are 0
    # whh_ref  : (D, D)       f32    hidden->hidden weight, pre-transposed
    # wlin_ref : (D, O_pad)   f32    linear weight, pre-transposed, lane-padded
    # blin_ref : (1, O_pad)   f32    linear bias, lane-padded
    # out_ref  : (B, O_pad)   f32    logits (columns >= O discarded outside)
    tok = tok_ref[...]                     # (B, S)
    p = p_ref[...]                         # hoisted: read each weight once
    whh = whh_ref[...]
    B, S = tok.shape
    V_pad = p.shape[0]
    D = whh.shape[0]

    # Lane iota reused by every timestep's one-hot construction.
    lane_iota = jax.lax.broadcasted_iota(jnp.int32, (B, V_pad), 1)

    # Hidden state lives in vregs (loop carry), f32 end-to-end: the serial
    # chain per step is MXU -> add -> tanh with no dtype casts.
    h = jnp.zeros((B, D), jnp.float32)
    for t in range(S):                     # S is static & small -> full unroll
        # On-chip embedding + input projection: one-hot row-select from P.
        # (Gather matmul does not depend on h, so it overlaps the recurrence.)
        onehot = (lane_iota == tok[:, t:t + 1]).astype(jnp.float32)   # (B, V_pad)
        x_t = jnp.dot(onehot, p, preferred_element_type=jnp.float32)  # (B, D), bias folded in
        h = jnp.tanh(x_t + jnp.dot(h, whh, preferred_element_type=jnp.float32))

    # Final linear on the last hidden state; lane-padded weights -> dense store.
    out_ref[...] = (jnp.dot(h, wlin_ref[...], preferred_element_type=jnp.float32)
                    + blin_ref[...])


def prepare_params(emb_table, w_ih, w_hh, b_ih, b_hh, w_lin, b_lin):
    """One-time weight preparation (run at load time, NOT per forward call)."""
    V, D = emb_table.shape
    O = w_lin.shape[0]
    V_pad = ((V + 127) // 128) * 128
    O_pad = ((O + 127) // 128) * 128

    emb = jnp.asarray(emb_table, jnp.float32).at[0].set(0.0)    # enforce padding_idx=0
    # Fold the input projection + both RNN biases into the embedding table.
    p = emb @ jnp.asarray(w_ih, jnp.float32).T \
        + (jnp.asarray(b_ih, jnp.float32) + jnp.asarray(b_hh, jnp.float32))  # (V, D)
    p = jnp.pad(p, ((0, V_pad - V), (0, 0)))                    # (V_pad, D)

    whh_t = jnp.asarray(w_hh, jnp.float32).T                    # (D, D)
    wlin_pad = jnp.pad(jnp.asarray(w_lin, jnp.float32).T,
                       ((0, 0), (0, O_pad - O)))                # (D, O_pad)
    blin_pad = jnp.pad(jnp.asarray(b_lin, jnp.float32).reshape(1, O),
                       ((0, 0), (0, O_pad - O)))                # (1, O_pad)

    return {"p_proj": p, "w_hh_t": whh_t, "w_lin_pad": wlin_pad,
            "b_lin_pad": blin_pad, "num_classes": O}


@functools.partial(jax.jit, static_argnums=(5,))
def _forward_impl(tokens, p_proj, w_hh_t, w_lin_pad, b_lin_pad, num_classes):
    B, S = tokens.shape
    O_pad = w_lin_pad.shape[1]
    vmem = pl.BlockSpec(memory_space=pltpu.MemorySpace.VMEM)
    # Grid-less single invocation: total working set ~40 KB << VMEM on any gen.
    out = pl.pallas_call(
        _rnn_classifier_kernel,
        out_shape=jax.ShapeDtypeStruct((B, O_pad), jnp.float32),
        in_specs=[vmem] * 5,
        out_specs=vmem,
    )(tokens, p_proj, w_hh_t, w_lin_pad, b_lin_pad)
    return out[:, :num_classes]


def torch_model_forward(tokens, params):
    """Pallas-backed equivalent of TorchModel.forward(x) (inference branch)."""
    return _forward_impl(tokens, params["p_proj"], params["w_hh_t"],
                         params["w_lin_pad"], params["b_lin_pad"],
                         params["num_classes"])


def reference_forward(tokens, emb_table, w_ih, w_hh, b_ih, b_hh, w_lin, b_lin):
    """Pure-JAX f32 reference mirroring PyTorch semantics, for validation."""
    x = jnp.take(emb_table, tokens, axis=0)                  # (B, S, D)
    B, S, D = x.shape
    h = jnp.zeros((B, D), jnp.float32)
    for t in range(S):
        h = jnp.tanh(x[:, t, :] @ w_ih.T + b_ih + h @ w_hh.T + b_hh)
    return h @ w_lin.T + b_lin


if __name__ == "__main__":
    # Small shapes consistent with the module: vocab=28, vector_dim=32, sentence_len=8
    VOCAB = 28
    D = 32          # vector_dim
    S = 8           # sentence_len
    O = S + 1       # linear output size
    B = 2           # batch

    key = jax.random.PRNGKey(0)
    k_emb, k_wih, k_whh, k_bih, k_bhh, k_wl, k_bl, k_tok = jax.random.split(key, 8)

    emb_table = 0.1 * jax.random.normal(k_emb, (VOCAB, D), jnp.float32)
    emb_table = emb_table.at[0].set(0.0)                     # padding_idx=0
    w_ih = 0.1 * jax.random.normal(k_wih, (D, D), jnp.float32)
    w_hh = 0.1 * jax.random.normal(k_whh, (D, D), jnp.float32)
    b_ih = 0.1 * jax.random.normal(k_bih, (D,), jnp.float32)
    b_hh = 0.1 * jax.random.normal(k_bhh, (D,), jnp.float32)
    w_lin = 0.1 * jax.random.normal(k_wl, (O, D), jnp.float32)
    b_lin = 0.1 * jax.random.normal(k_bl, (O,), jnp.float32)

    tokens = jax.random.randint(k_tok, (B, S), 0, VOCAB, jnp.int32)

    # One-time weight prep (hoisted out of the per-call hot path).
    params = jax.tree_util.tree_map(
        lambda x: x, prepare_params(emb_table, w_ih, w_hh, b_ih, b_hh, w_lin, b_lin))

    # TODO(synk): nn.CrossEntropyLoss training branch (y is not None) not implemented;
    # only the inference forward (logits) is reproduced.
    logits = torch_model_forward(tokens, params)
    logits = jax.block_until_ready(logits)

    ref = reference_forward(tokens, emb_table, w_ih, w_hh, b_ih, b_hh,
                            w_lin, b_lin)
    assert logits.shape == (B, O)
    assert jnp.allclose(logits, ref, atol=1e-2, rtol=1e-2), \
        f"max abs diff = {jnp.max(jnp.abs(logits - ref))}"
    print("KERNEL_OK")
</pallas_src>

<mosaic_0001>
module attributes {stable_mosaic.version = 11 : i64} {
  func.func @_rnn_classifier_kernel(%arg0: memref<2x8xi32, #tpu.memory_space<vmem>>, %arg1: memref<128x32xf32, #tpu.memory_space<vmem>>, %arg2: memref<32x32xf32, #tpu.memory_space<vmem>>, %arg3: memref<32x128xf32, #tpu.memory_space<vmem>>, %arg4: memref<1x128xf32, #tpu.memory_space<vmem>>, %arg5: memref<2x128xf32, #tpu.memory_space<vmem>>) attributes {dimension_semantics = [], scalar_prefetch = 0 : i64, scratch_operands = 0 : i64, tpu.core_type = #tpu.core_type<tc>} {
    %c0 = arith.constant 0 : index
    %c0_0 = arith.constant 0 : index
    %0 = vector.load %arg0[%c0, %c0_0] : memref<2x8xi32, #tpu.memory_space<vmem>>, vector<2x8xi32>
    %c0_1 = arith.constant 0 : index
    %c0_2 = arith.constant 0 : index
    %1 = vector.load %arg1[%c0_1, %c0_2] : memref<128x32xf32, #tpu.memory_space<vmem>>, vector<128x32xf32>
    %c0_3 = arith.constant 0 : index
    %c0_4 = arith.constant 0 : index
    %2 = vector.load %arg2[%c0_3, %c0_4] : memref<32x32xf32, #tpu.memory_space<vmem>>, vector<32x32xf32>
    %3 = tpu.iota {dimensions = array<i32: 1>} : vector<2x128xi32>
    %cst = arith.constant 0.000000e+00 : f32
    %4 = vector.broadcast %cst : f32 to vector<2x32xf32>
    %5 = vector.extract_strided_slice %0 {offsets = [0, 0], sizes = [2, 1], strides = [1, 1]} : vector<2x8xi32> to vector<2x1xi32>
    %6 = vector.broadcast %5 : vector<2x1xi32> to vector<2x128xi32>
    %7 = arith.cmpi eq, %3, %6 : vector<2x128xi32>
    %8 = arith.extui %7 : vector<2x128xi1> to vector<2x128xi32>
    %9 = arith.sitofp %8 : vector<2x128xi32> to vector<2x128xf32>
    %cst_5 = arith.constant dense<0.000000e+00> : vector<2x32xf32>
    %10 = tpu.matmul %9, %1, %cst_5 {dimension_numbers = #tpu.dot_dimension_numbers<[1], [0], [0], [1], [0, 0, 1, 1], [], []>} : vector<2x128xf32>, vector<128x32xf32>, vector<2x32xf32> -> vector<2x32xf32>
    %cst_6 = arith.constant dense<0.000000e+00> : vector<2x32xf32>
    %11 = tpu.matmul %4, %2, %cst_6 {dimension_numbers = #tpu.dot_dimension_numbers<[1], [0], [0], [1], [0, 0, 1, 1], [], []>} : vector<2x32xf32>, vector<32x32xf32>, vector<2x32xf32> -> vector<2x32xf32>
    %12 = arith.addf %10, %11 : vector<2x32xf32>
    %13 = math.tanh %12 : vector<2x32xf32>
    %14 = vector.extract_strided_slice %0 {offsets = [0, 1], sizes = [2, 1], strides = [1, 1]} : vector<2x8xi32> to vector<2x1xi32>
    %15 = vector.broadcast %14 : vector<2x1xi32> to vector<2x128xi32>
    %16 = arith.cmpi eq, %3, %15 : vector<2x128xi32>
    %17 = arith.extui %16 : vector<2x128xi1> to vector<2x128xi32>
    %18 = arith.sitofp %17 : vector<2x128xi32> to vector<2x128xf32>
    %cst_7 = arith.constant dense<0.000000e+00> : vector<2x32xf32>
    %19 = tpu.matmul %18, %1, %cst_7 {dimension_numbers = #tpu.dot_dimension_numbers<[1], [0], [0], [1], [0, 0, 1, 1], [], []>} : vector<2x128xf32>, vector<128x32xf32>, vector<2x32xf32> -> vector<2x32xf32>
    %cst_8 = arith.constant dense<0.000000e+00> : vector<2x32xf32>
    %20 = tpu.matmul %13, %2, %cst_8 {dimension_numbers = #tpu.dot_dimension_numbers<[1], [0], [0], [1], [0, 0, 1, 1], [], []>} : vector<2x32xf32>, vector<32x32xf32>, vector<2x32xf32> -> vector<2x32xf32>
    %21 = arith.addf %19, %20 : vector<2x32xf32>
    %22 = math.tanh %21 : vector<2x32xf32>
    %23 = vector.extract_strided_slice %0 {offsets = [0, 2], sizes = [2, 1], strides = [1, 1]} : vector<2x8xi32> to vector<2x1xi32>
    %24 = vector.broadcast %23 : vector<2x1xi32> to vector<2x128xi32>
    %25 = arith.cmpi eq, %3, %24 : vector<2x128xi32>
    %26 = arith.extui %25 : vector<2x128xi1> to vector<2x128xi32>
    %27 = arith.sitofp %26 : vector<2x128xi32> to vector<2x128xf32>
    %cst_9 = arith.constant dense<0.000000e+00> : vector<2x32xf32>
    %28 = tpu.matmul %27, %1, %cst_9 {dimension_numbers = #tpu.dot_dimension_numbers<[1], [0], [0], [1], [0, 0, 1, 1], [], []>} : vector<2x128xf32>, vector<128x32xf32>, vector<2x32xf32> -> vector<2x32xf32>
    %cst_10 = arith.constant dense<0.000000e+00> : vector<2x32xf32>
    %29 = tpu.matmul %22, %2, %cst_10 {dimension_numbers = #tpu.dot_dimension_numbers<[1], [0], [0], [1], [0, 0, 1, 1], [], []>} : vector<2x32xf32>, vector<32x32xf32>, vector<2x32xf32> -> vector<2x32xf32>
    %30 = arith.addf %28, %29 : vector<2x32xf32>
    %31 = math.tanh %30 : vector<2x32xf32>
    %32 = vector.extract_strided_slice %0 {offsets = [0, 3], sizes = [2, 1], strides = [1, 1]} : vector<2x8xi32> to vector<2x1xi32>
    %33 = vector.broadcast %32 : vector<2x1xi32> to vector<2x128xi32>
    %34 = arith.cmpi eq, %3, %33 : vector<2x128xi32>
    %35 = arith.extui %34 : vector<2x128xi1> to vector<2x128xi32>
    %36 = arith.sitofp %35 : vector<2x128xi32> to vector<2x128xf32>
    %cst_11 = arith.constant dense<0.000000e+00> : vector<2x32xf32>
    %37 = tpu.matmul %36, %1, %cst_11 {dimension_numbers = #tpu.dot_dimension_numbers<[1], [0], [0], [1], [0, 0, 1, 1], [], []>} : vector<2x128xf32>, vector<128x32xf32>, vector<2x32xf32> -> vector<2x32xf32>
    %cst_12 = arith.constant dense<0.000000e+00> : vector<2x32xf32>
    %38 = tpu.matmul %31, %2, %cst_12 {dimension_numbers = #tpu.dot_dimension_numbers<[1], [0], [0], [1], [0, 0, 1, 1], [], []>} : vector<2x32xf32>, vector<32x32xf32>, vector<2x32xf32> -> vector<2x32xf32>
    %39 = arith.addf %37, %38 : vector<2x32xf32>
    %40 = math.tanh %39 : vector<2x32xf32>
    %41 = vector.extract_strided_slice %0 {offsets = [0, 4], sizes = [2, 1], strides = [1, 1]} : vector<2x8xi32> to vector<2x1xi32>
    %42 = vector.broadcast %41 : vector<2x1xi32> to vector<2x128xi32>
    %43 = arith.cmpi eq, %3, %42 : vector<2x128xi32>
    %44 = arith.extui %43 : vector<2x128xi1> to vector<2x128xi32>
    %45 = arith.sitofp %44 : vector<2x128xi32> to vector<2x128xf32>
    %cst_13 = arith.constant dense<0.000000e+00> : vector<2x32xf32>
    %46 = tpu.matmul %45, %1, %cst_13 {dimension_numbers = #tpu.dot_dimension_numbers<[1], [0], [0], [1], [0, 0, 1, 1], [], []>} : vector<2x128xf32>, vector<128x32xf32>, vector<2x32xf32> -> vector<2x32xf32>
    %cst_14 = arith.constant dense<0.000000e+00> : vector<2x32xf32>
    %47 = tpu.matmul %40, %2, %cst_14 {dimension_numbers = #tpu.dot_dimension_numbers<[1], [0], [0], [1], [0, 0, 1, 1], [], []>} : vector<2x32xf32>, vector<32x32xf32>, vector<2x32xf32> -> vector<2x32xf32>
    %48 = arith.addf %46, %47 : vector<2x32xf32>
    %49 = math.tanh %48 : vector<2x32xf32>
    %50 = vector.extract_strided_slice %0 {offsets = [0, 5], sizes = [2, 1], strides = [1, 1]} : vector<2x8xi32> to vector<2x1xi32>
    %51 = vector.broadcast %50 : vector<2x1xi32> to vector<2x128xi32>
    %52 = arith.cmpi eq, %3, %51 : vector<2x128xi32>
    %53 = arith.extui %52 : vector<2x128xi1> to vector<2x128xi32>
    %54 = arith.sitofp %53 : vector<2x128xi32> to vector<2x128xf32>
    %cst_15 = arith.constant dense<0.000000e+00> : vector<2x32xf32>
    %55 = tpu.matmul %54, %1, %cst_15 {dimension_numbers = #tpu.dot_dimension_numbers<[1], [0], [0], [1], [0, 0, 1, 1], [], []>} : vector<2x128xf32>, vector<128x32xf32>, vector<2x32xf32> -> vector<2x32xf32>
    %cst_16 = arith.constant dense<0.000000e+00> : vector<2x32xf32>
    %56 = tpu.matmul %49, %2, %cst_16 {dimension_numbers = #tpu.dot_dimension_numbers<[1], [0], [0], [1], [0, 0, 1, 1], [], []>} : vector<2x32xf32>, vector<32x32xf32>, vector<2x32xf32> -> vector<2x32xf32>
    %57 = arith.addf %55, %56 : vector<2x32xf32>
    %58 = math.tanh %57 : vector<2x32xf32>
    %59 = vector.extract_strided_slice %0 {offsets = [0, 6], sizes = [2, 1], strides = [1, 1]} : vector<2x8xi32> to vector<2x1xi32>
    %60 = vector.broadcast %59 : vector<2x1xi32> to vector<2x128xi32>
    %61 = arith.cmpi eq, %3, %60 : vector<2x128xi32>
    %62 = arith.extui %61 : vector<2x128xi1> to vector<2x128xi32>
    %63 = arith.sitofp %62 : vector<2x128xi32> to vector<2x128xf32>
    %cst_17 = arith.constant dense<0.000000e+00> : vector<2x32xf32>
    %64 = tpu.matmul %63, %1, %cst_17 {dimension_numbers = #tpu.dot_dimension_numbers<[1], [0], [0], [1], [0, 0, 1, 1], [], []>} : vector<2x128xf32>, vector<128x32xf32>, vector<2x32xf32> -> vector<2x32xf32>
    %cst_18 = arith.constant dense<0.000000e+00> : vector<2x32xf32>
    %65 = tpu.matmul %58, %2, %cst_18 {dimension_numbers = #tpu.dot_dimension_numbers<[1], [0], [0], [1], [0, 0, 1, 1], [], []>} : vector<2x32xf32>, vector<32x32xf32>, vector<2x32xf32> -> vector<2x32xf32>
    %66 = arith.addf %64, %65 : vector<2x32xf32>
    %67 = math.tanh %66 : vector<2x32xf32>
    %68 = vector.extract_strided_slice %0 {offsets = [0, 7], sizes = [2, 1], strides = [1, 1]} : vector<2x8xi32> to vector<2x1xi32>
    %69 = vector.broadcast %68 : vector<2x1xi32> to vector<2x128xi32>
    %70 = arith.cmpi eq, %3, %69 : vector<2x128xi32>
    %71 = arith.extui %70 : vector<2x128xi1> to vector<2x128xi32>
    %72 = arith.sitofp %71 : vector<2x128xi32> to vector<2x128xf32>
    %cst_19 = arith.constant dense<0.000000e+00> : vector<2x32xf32>
    %73 = tpu.matmul %72, %1, %cst_19 {dimension_numbers = #tpu.dot_dimension_numbers<[1], [0], [0], [1], [0, 0, 1, 1], [], []>} : vector<2x128xf32>, vector<128x32xf32>, vector<2x32xf32> -> vector<2x32xf32>
    %cst_20 = arith.constant dense<0.000000e+00> : vector<2x32xf32>
    %74 = tpu.matmul %67, %2, %cst_20 {dimension_numbers = #tpu.dot_dimension_numbers<[1], [0], [0], [1], [0, 0, 1, 1], [], []>} : vector<2x32xf32>, vector<32x32xf32>, vector<2x32xf32> -> vector<2x32xf32>
    %75 = arith.addf %73, %74 : vector<2x32xf32>
    %76 = math.tanh %75 : vector<2x32xf32>
    %c0_21 = arith.constant 0 : index
    %c0_22 = arith.constant 0 : index
    %77 = vector.load %arg3[%c0_21, %c0_22] : memref<32x128xf32, #tpu.memory_space<vmem>>, vector<32x128xf32>
    %cst_23 = arith.constant dense<0.000000e+00> : vector<2x128xf32>
    %78 = tpu.matmul %76, %77, %cst_23 {dimension_numbers = #tpu.dot_dimension_numbers<[1], [0], [0], [1], [0, 0, 1, 1], [], []>} : vector<2x32xf32>, vector<32x128xf32>, vector<2x128xf32> -> vector<2x128xf32>
    %c0_24 = arith.constant 0 : index
    %c0_25 = arith.constant 0 : index
    %79 = vector.load %arg4[%c0_24, %c0_25] : memref<1x128xf32, #tpu.memory_space<vmem>>, vector<1x128xf32>
    %80 = vector.broadcast %79 : vector<1x128xf32> to vector<2x128xf32>
    %81 = arith.addf %78, %80 : vector<2x128xf32>
    %c0_26 = arith.constant 0 : index
    %c0_27 = arith.constant 0 : index
    %82 = vector.load %arg5[%c0_26, %c0_27] : memref<2x128xf32, #tpu.memory_space<vmem>>, vector<2x128xf32>
    tpu.vector_store %arg5[%c0_26, %c0_27], %81 {strides = array<i32>} : memref<2x128xf32, #tpu.memory_space<vmem>>, vector<2x128xf32>,
    return
  }
}

</mosaic_0001>

<llo_original>
// kernel: _forward_impl.1
$region0: #{_forward_impl.1}
  #allocation0 [shape = 'u32[]', space=smem, size = 0x4, offset = 0x4, fixed_abs, tag = 'smem constant byte address 0x4 - core index']
  #allocation1 [shape = 'u32[72,128]{1,0:T(1,128)}', space=vmem, size = 0x9000, scoped, tag = 'internal scratch']
  %s0 = inlined_call_operand.vmem [shape: s32[2,8], index: 0, kind: input, shape index: {}]
  %s1 = inlined_call_operand.vmem [shape: f32[128,32], index: 1, kind: input, shape index: {}]
  %s2 = inlined_call_operand.vmem [shape: f32[32,32], index: 2, kind: input, shape index: {}]
  %s3 = inlined_call_operand.vmem [shape: f32[32,128], index: 3, kind: input, shape index: {}]
  %s4 = inlined_call_operand.vmem [shape: f32[1,128], index: 4, kind: input, shape index: {}]
  %s5 = inlined_call_operand.hbm [shape: f32[2,128], index: 5, kind: output, shape index: {}]
  %s6 = sld [smem:[#allocation0]]
  $region30: #{_forward_impl.1} parent=0
    _
  %s8 = ssub.s32 1, %s6
  %s9 = scalar_select 0, %s8, %s6
  $region1: #{_forward_impl.1} parent=0
    #allocation2 [shape = 'u8[1024]{0}', space=vmem, size = 0x400, scoped, tag = 'output window, operand 0, single buffered']
    #allocation3 [shape = 's32[1]{0}', space=sflag, size = 0x4, scoped, tag = 'scoped memory for _forward_impl.1']
    %10 = vsyncpa [#allocation3], 0
    // Predicated region
    $region2: #{_forward_impl.1} parent=1 // pred_check
      _
    $region3: #{_forward_impl.1} parent=1 // pred_check_branch
      %12 = sbr.rel (0) target = $region5
    $region4: #{_forward_impl.1} parent=1 // pred_region
      _
    $region5: #{_forward_impl.1} parent=1 // pred_fallthru
      _
    // Predicated region
    $region6: #{_forward_impl.1} parent=1 // pred_check
      _
    $region7: #{_forward_impl.1} parent=1 // pred_check_branch
      %14 = sbr.rel (0) target = $region9
    $region8: #{_forward_impl.1} parent=1 // pred_region
      _
    $region9: #{_forward_impl.1} parent=1 // pred_fallthru
      _
    // Predicated region
    $region10: #{_forward_impl.1} parent=1 // pred_check
      _
    $region11: #{_forward_impl.1} parent=1 // pred_check_branch
      %16 = sbr.rel (0) target = $region13
    $region12: #{_forward_impl.1} parent=1 // pred_region
      _
    $region13: #{_forward_impl.1} parent=1 // pred_fallthru
      _
    // Predicated region
    $region14: #{_forward_impl.1} parent=1 // pred_check
      _
    $region15: #{_forward_impl.1} parent=1 // pred_check_branch
      %18 = sbr.rel (0) target = $region17
    $region16: #{_forward_impl.1} parent=1 // pred_region
      _
    $region17: #{_forward_impl.1} parent=1 // pred_fallthru
      _
    // Predicated region
    $region18: #{_forward_impl.1} parent=1 // pred_check
      _
    $region19: #{_forward_impl.1} parent=1 // pred_check_branch
      %20 = sbr.rel (0) target = $region21
    $region20: #{_forward_impl.1} parent=1 // pred_region
      _
    $region21: #{_forward_impl.1} parent=1 // pred_fallthru
      _
    %v21 = vld [vmem:[%s0] sm:$0x3]
    %v22 = vld [vmem:[%s1] sm:$0xff]
    %v23 = vld [vmem:[%s1 + $0x8] sm:$0xff]
    %v24 = vld [vmem:[%s1 + $0x10] sm:$0xff]
    %v25 = vld [vmem:[%s1 + $0x18] sm:$0xff]
    %v26 = vld [vmem:[%s1 + $0x20] sm:$0xff]
    %v27 = vld [vmem:[%s1 + $0x28] sm:$0xff]
    %v28 = vld [vmem:[%s1 + $0x30] sm:$0xff]
    %v29 = vld [vmem:[%s1 + $0x38] sm:$0xff]
    %v30 = vld [vmem:[%s1 + $0x40] sm:$0xff]
    %v31 = vld [vmem:[%s1 + $0x48] sm:$0xff]
    %v32 = vld [vmem:[%s1 + $0x50] sm:$0xff]
    %v33 = vld [vmem:[%s1 + $0x58] sm:$0xff]
    %v34 = vld [vmem:[%s1 + $0x60] sm:$0xff]
    %v35 = vld [vmem:[%s1 + $0x68] sm:$0xff]
    %v36 = vld [vmem:[%s1 + $0x70] sm:$0xff]
    %v37 = vld [vmem:[%s1 + $0x78] sm:$0xff]
    %v38 = vld [vmem:[%s2] sm:$0xff]
    %v39 = vld [vmem:[%s2 + $0x8] sm:$0xff]
    %v40 = vld [vmem:[%s2 + $0x10] sm:$0xff]
    %v41 = vld [vmem:[%s2 + $0x18] sm:$0xff]
    %v42 = vlaneseq
    %v43 = vand.u32 %v42, 127
    %44 = vset.pattern.permute.xlu0 0
    %45 = vperm.xlu0 %44, %v21
    %v46 = vpop.permute.xlu0 %45
    %vm47 = vcmp.eq.s32.totalorder %v43, %v46
    %v48 = vsel %vm47, 1, 0
    %v49 = vcvt.s32.f32 %v48
    %vm50 = vcmask 261120
    %v52 = vsel %vm50, 0.0, 0
    %54 = vmatpush.msra.mxu0 0.0
    %55 = vmatpush.msra.mxu0 0.0
    %56 = vmatpush.msra.mxu0 0.0
    %57 = vmatpush.msra.mxu0 0.0
    %58 = vmatpush.msra.mxu0 0.0
    %59 = vmatpush.msra.mxu0 0.0
    %60 = vmatpush.msra.mxu0 0.0
    %61 = vmatpush.msra.mxu0 0.0
    %62 = vmatpush.msra.mxu0 0.0
    %63 = vmatpush.msra.mxu0 0.0
    %64 = vmatpush.msra.mxu0 0.0
    %65 = vmatpush.msra.mxu0 0.0
    %66 = vmatpush.msra.mxu0 %v41
    %67 = vmatpush.msra.mxu0 %v40
    %68 = vmatpush.msra.mxu0 %v39
    %69 = vmatpush.msra.mxu0 %v38
    %70 = vmatmul.f32.gmra.mxu0 %v52
    %v71 = vpop.f32.mrf.mxu0
    %v72 = vadd.f32 0.0, %v71
    %73 = vdwg.mxu0
    %74 = vmatpush.msra.mxu0 %v37
    %75 = vmatpush.msra.mxu0 %v36
    %76 = vmatpush.msra.mxu0 %v35
    %77 = vmatpush.msra.mxu0 %v34
    %78 = vmatpush.msra.mxu0 %v33
    %79 = vmatpush.msra.mxu0 %v32
    %80 = vmatpush.msra.mxu0 %v31
    %81 = vmatpush.msra.mxu0 %v30
    %82 = vmatpush.msra.mxu0 %v29
    %83 = vmatpush.msra.mxu0 %v28
    %84 = vmatpush.msra.mxu0 %v27
    %85 = vmatpush.msra.mxu0 %v26
    %86 = vmatpush.msra.mxu0 %v25
    %87 = vmatpush.msra.mxu0 %v24
    %88 = vmatpush.msra.mxu0 %v23
    %89 = vmatpush.msra.mxu0 %v22
    %90 = vmatmul.f32.gmra.mxu0 %v49
    %v91 = vpop.f32.mrf.mxu0
    %v92 = vadd.f32 %v72, %v91
    %93 = vdwg.mxu0
    %v94 = vtanh.pop %v92
    %95 = vset.pattern.permute.xlu0 1
    %96 = vperm.xlu0 %95, %v21
    %v97 = vpop.permute.xlu0 %96
    %vm98 = vcmp.eq.s32.totalorder %v43, %v97
    %v99 = vsel %vm98, 1, 0
    %v100 = vcvt.s32.f32 %v99
    %v102 = vsel %vm50, %v94, 0
    %104 = vmatpush.msra.mxu0 0.0
    %105 = vmatpush.msra.mxu0 0.0
    %106 = vmatpush.msra.mxu0 0.0
    %107 = vmatpush.msra.mxu0 0.0
    %108 = vmatpush.msra.mxu0 0.0
    %109 = vmatpush.msra.mxu0 0.0
    %110 = vmatpush.msra.mxu0 0.0
    %111 = vmatpush.msra.mxu0 0.0
    %112 = vmatpush.msra.mxu0 0.0
    %113 = vmatpush.msra.mxu0 0.0
    %114 = vmatpush.msra.mxu0 0.0
    %115 = vmatpush.msra.mxu0 0.0
    %116 = vmatpush.msra.mxu0 %v41
    %117 = vmatpush.msra.mxu0 %v40
    %118 = vmatpush.msra.mxu0 %v39
    %119 = vmatpush.msra.mxu0 %v38
    %120 = vmatmul.f32.gmra.mxu0 %v102
    %v121 = vpop.f32.mrf.mxu0
    %v122 = vadd.f32 0.0, %v121
    %123 = vdwg.mxu0
    %124 = vmatpush.msra.mxu0 %v37
    %125 = vmatpush.msra.mxu0 %v36
    %126 = vmatpush.msra.mxu0 %v35
    %127 = vmatpush.msra.mxu0 %v34
    %128 = vmatpush.msra.mxu0 %v33
    %129 = vmatpush.msra.mxu0 %v32
    %130 = vmatpush.msra.mxu0 %v31
    %131 = vmatpush.msra.mxu0 %v30
    %132 = vmatpush.msra.mxu0 %v29
    %133 = vmatpush.msra.mxu0 %v28
    %134 = vmatpush.msra.mxu0 %v27
    %135 = vmatpush.msra.mxu0 %v26
    %136 = vmatpush.msra.mxu0 %v25
    %137 = vmatpush.msra.mxu0 %v24
    %138 = vmatpush.msra.mxu0 %v23
    %139 = vmatpush.msra.mxu0 %v22
    %140 = vmatmul.f32.gmra.mxu0 %v100
    %v141 = vpop.f32.mrf.mxu0
    %v142 = vadd.f32 %v122, %v141
    %143 = vdwg.mxu0
    %v144 = vtanh.pop %v142
    %145 = vset.pattern.permute.xlu0 2
    %146 = vperm.xlu0 %145, %v21
    %v147 = vpop.permute.xlu0 %146
    %vm148 = vcmp.eq.s32.totalorder %v43, %v147
    %v149 = vsel %vm148, 1, 0
    %v150 = vcvt.s32.f32 %v149
    %v152 = vsel %vm50, %v144, 0
    %154 = vmatpush.msra.mxu0 0.0
    %155 = vmatpush.msra.mxu0 0.0
    %156 = vmatpush.msra.mxu0 0.0
    %157 = vmatpush.msra.mxu0 0.0
    %158 = vmatpush.msra.mxu0 0.0
    %159 = vmatpush.msra.mxu0 0.0
    %160 = vmatpush.msra.mxu0 0.0
    %161 = vmatpush.msra.mxu0 0.0
    %162 = vmatpush.msra.mxu0 0.0
    %163 = vmatpush.msra.mxu0 0.0
    %164 = vmatpush.msra.mxu0 0.0
    %165 = vmatpush.msra.mxu0 0.0
    %166 = vmatpush.msra.mxu0 %v41
    %167 = vmatpush.msra.mxu0 %v40
    %168 = vmatpush.msra.mxu0 %v39
    %169 = vmatpush.msra.mxu0 %v38
    %170 = vmatmul.f32.gmra.mxu0 %v152
    %v171 = vpop.f32.mrf.mxu0
    %v172 = vadd.f32 0.0, %v171
    %173 = vdwg.mxu0
    %174 = vmatpush.msra.mxu0 %v37
    %175 = vmatpush.msra.mxu0 %v36
    %176 = vmatpush.msra.mxu0 %v35
    %177 = vmatpush.msra.mxu0 %v34
    %178 = vmatpush.msra.mxu0 %v33
    %179 = vmatpush.msra.mxu0 %v32
    %180 = vmatpush.msra.mxu0 %v31
    %181 = vmatpush.msra.mxu0 %v30
    %182 = vmatpush.msra.mxu0 %v29
    %183 = vmatpush.msra.mxu0 %v28
    %184 = vmatpush.msra.mxu0 %v27
    %185 = vmatpush.msra.mxu0 %v26
    %186 = vmatpush.msra.mxu0 %v25
    %187 = vmatpush.msra.mxu0 %v24
    %188 = vmatpush.msra.mxu0 %v23
    %189 = vmatpush.msra.mxu0 %v22
    %190 = vmatmul.f32.gmra.mxu0 %v150
    %v191 = vpop.f32.mrf.mxu0
    %v192 = vadd.f32 %v172, %v191
    %193 = vdwg.mxu0
    %v194 = vtanh.pop %v192
    %195 = vset.pattern.permute.xlu0 3
    %196 = vperm.xlu0 %195, %v21
    %v197 = vpop.permute.xlu0 %196
    %vm198 = vcmp.eq.s32.totalorder %v43, %v197
    %v199 = vsel %vm198, 1, 0
    %v200 = vcvt.s32.f32 %v199
    %v202 = vsel %vm50, %v194, 0
    %204 = vmatpush.msra.mxu0 0.0
    %205 = vmatpush.msra.mxu0 0.0
    %206 = vmatpush.msra.mxu0 0.0
    %207 = vmatpush.msra.mxu0 0.0
    %208 = vmatpush.msra.mxu0 0.0
    %209 = vmatpush.msra.mxu0 0.0
    %210 = vmatpush.msra.mxu0 0.0
    %211 = vmatpush.msra.mxu0 0.0
    %212 = vmatpush.msra.mxu0 0.0
    %213 = vmatpush.msra.mxu0 0.0
    %214 = vmatpush.msra.mxu0 0.0
    %215 = vmatpush.msra.mxu0 0.0
    %216 = vmatpush.msra.mxu0 %v41
    %217 = vmatpush.msra.mxu0 %v40
    %218 = vmatpush.msra.mxu0 %v39
    %219 = vmatpush.msra.mxu0 %v38
    %220 = vmatmul.f32.gmra.mxu0 %v202
    %v221 = vpop.f32.mrf.mxu0
    %v222 = vadd.f32 0.0, %v221
    %223 = vdwg.mxu0
    %224 = vmatpush.msra.mxu0 %v37
    %225 = vmatpush.msra.mxu0 %v36
    %226 = vmatpush.msra.mxu0 %v35
    %227 = vmatpush.msra.mxu0 %v34
    %228 = vmatpush.msra.mxu0 %v33
    %229 = vmatpush.msra.mxu0 %v32
    %230 = vmatpush.msra.mxu0 %v31
    %231 = vmatpush.msra.mxu0 %v30
    %232 = vmatpush.msra.mxu0 %v29
    %233 = vmatpush.msra.mxu0 %v28
    %234 = vmatpush.msra.mxu0 %v27
    %235 = vmatpush.msra.mxu0 %v26
    %236 = vmatpush.msra.mxu0 %v25
    %237 = vmatpush.msra.mxu0 %v24
    %238 = vmatpush.msra.mxu0 %v23
    %239 = vmatpush.msra.mxu0 %v22
    %240 = vmatmul.f32.gmra.mxu0 %v200
    %v241 = vpop.f32.mrf.mxu0
    %v242 = vadd.f32 %v222, %v241
    %243 = vdwg.mxu0
    %v244 = vtanh.pop %v242
    %245 = vset.pattern.permute.xlu0 4
    %246 = vperm.xlu0 %245, %v21
    %v247 = vpop.permute.xlu0 %246
    %vm248 = vcmp.eq.s32.totalorder %v43, %v247
    %v249 = vsel %vm248, 1, 0
    %v250 = vcvt.s32.f32 %v249
    %v252 = vsel %vm50, %v244, 0
    %254 = vmatpush.msra.mxu0 0.0
    %255 = vmatpush.msra.mxu0 0.0
    %256 = vmatpush.msra.mxu0 0.0
    %257 = vmatpush.msra.mxu0 0.0
    %258 = vmatpush.msra.mxu0 0.0
    %259 = vmatpush.msra.mxu0 0.0
    %260 = vmatpush.msra.mxu0 0.0
    %261 = vmatpush.msra.mxu0 0.0
    %262 = vmatpush.msra.mxu0 0.0
    %263 = vmatpush.msra.mxu0 0.0
    %264 = vmatpush.msra.mxu0 0.0
    %265 = vmatpush.msra.mxu0 0.0
    %266 = vmatpush.msra.mxu0 %v41
    %267 = vmatpush.msra.mxu0 %v40
    %268 = vmatpush.msra.mxu0 %v39
    %269 = vmatpush.msra.mxu0 %v38
    %270 = vmatmul.f32.gmra.mxu0 %v252
    %v271 = vpop.f32.mrf.mxu0
    %v272 = vadd.f32 0.0, %v271
    %273 = vdwg.mxu0
    %274 = vmatpush.msra.mxu0 %v37
    %275 = vmatpush.msra.mxu0 %v36
    %276 = vmatpush.msra.mxu0 %v35
    %277 = vmatpush.msra.mxu0 %v34
    %278 = vmatpush.msra.mxu0 %v33
    %279 = vmatpush.msra.mxu0 %v32
    %280 = vmatpush.msra.mxu0 %v31
    %281 = vmatpush.msra.mxu0 %v30
    %282 = vmatpush.msra.mxu0 %v29
    %283 = vmatpush.msra.mxu0 %v28
    %284 = vmatpush.msra.mxu0 %v27
    %285 = vmatpush.msra.mxu0 %v26
    %286 = vmatpush.msra.mxu0 %v25
    %287 = vmatpush.msra.mxu0 %v24
    %288 = vmatpush.msra.mxu0 %v23
    %289 = vmatpush.msra.mxu0 %v22
    %290 = vmatmul.f32.gmra.mxu0 %v250
    %v291 = vpop.f32.mrf.mxu0
    %v292 = vadd.f32 %v272, %v291
    %293 = vdwg.mxu0
    %v294 = vtanh.pop %v292
    %295 = vset.pattern.permute.xlu0 5
    %296 = vperm.xlu0 %295, %v21
    %v297 = vpop.permute.xlu0 %296
    %vm298 = vcmp.eq.s32.totalorder %v43, %v297
    %v299 = vsel %vm298, 1, 0
    %v300 = vcvt.s32.f32 %v299
    %v302 = vsel %vm50, %v294, 0
    %304 = vmatpush.msra.mxu0 0.0
    %305 = vmatpush.msra.mxu0 0.0
    %306 = vmatpush.msra.mxu0 0.0
    %307 = vmatpush.msra.mxu0 0.0
    %308 = vmatpush.msra.mxu0 0.0
    %309 = vmatpush.msra.mxu0 0.0
    %310 = vmatpush.msra.mxu0 0.0
    %311 = vmatpush.msra.mxu0 0.0
    %312 = vmatpush.msra.mxu0 0.0
    %313 = vmatpush.msra.mxu0 0.0
    %314 = vmatpush.msra.mxu0 0.0
    %315 = vmatpush.msra.mxu0 0.0
    %316 = vmatpush.msra.mxu0 %v41
    %317 = vmatpush.msra.mxu0 %v40
    %318 = vmatpush.msra.mxu0 %v39
    %319 = vmatpush.msra.mxu0 %v38
    %320 = vmatmul.f32.gmra.mxu0 %v302
    %v321 = vpop.f32.mrf.mxu0
    %v322 = vadd.f32 0.0, %v321
    %323 = vdwg.mxu0
    %324 = vmatpush.msra.mxu0 %v37
    %325 = vmatpush.msra.mxu0 %v36
    %326 = vmatpush.msra.mxu0 %v35
    %327 = vmatpush.msra.mxu0 %v34
    %328 = vmatpush.msra.mxu0 %v33
    %329 = vmatpush.msra.mxu0 %v32
    %330 = vmatpush.msra.mxu0 %v31
    %331 = vmatpush.msra.mxu0 %v30
    %332 = vmatpush.msra.mxu0 %v29
    %333 = vmatpush.msra.mxu0 %v28
    %334 = vmatpush.msra.mxu0 %v27
    %335 = vmatpush.msra.mxu0 %v26
    %336 = vmatpush.msra.mxu0 %v25
    %337 = vmatpush.msra.mxu0 %v24
    %338 = vmatpush.msra.mxu0 %v23
    %339 = vmatpush.msra.mxu0 %v22
    %340 = vmatmul.f32.gmra.mxu0 %v300
    %v341 = vpop.f32.mrf.mxu0
    %v342 = vadd.f32 %v322, %v341
    %343 = vdwg.mxu0
    %v344 = vtanh.pop %v342
    %345 = vset.pattern.permute.xlu0 6
    %346 = vperm.xlu0 %345, %v21
    %v347 = vpop.permute.xlu0 %346
    %vm348 = vcmp.eq.s32.totalorder %v43, %v347
    %v349 = vsel %vm348, 1, 0
    %v350 = vcvt.s32.f32 %v349
    %v352 = vsel %vm50, %v344, 0
    %354 = vmatpush.msra.mxu0 0.0
    %355 = vmatpush.msra.mxu0 0.0
    %356 = vmatpush.msra.mxu0 0.0
    %357 = vmatpush.msra.mxu0 0.0
    %358 = vmatpush.msra.mxu0 0.0
    %359 = vmatpush.msra.mxu0 0.0
    %360 = vmatpush.msra.mxu0 0.0
    %361 = vmatpush.msra.mxu0 0.0
    %362 = vmatpush.msra.mxu0 0.0
    %363 = vmatpush.msra.mxu0 0.0
    %364 = vmatpush.msra.mxu0 0.0
    %365 = vmatpush.msra.mxu0 0.0
    %366 = vmatpush.msra.mxu0 %v41
    %367 = vmatpush.msra.mxu0 %v40
    %368 = vmatpush.msra.mxu0 %v39
    %369 = vmatpush.msra.mxu0 %v38
    %370 = vmatmul.f32.gmra.mxu0 %v352
    %v371 = vpop.f32.mrf.mxu0
    %v372 = vadd.f32 0.0, %v371
    %373 = vdwg.mxu0
    %374 = vmatpush.msra.mxu0 %v37
    %375 = vmatpush.msra.mxu0 %v36
    %376 = vmatpush.msra.mxu0 %v35
    %377 = vmatpush.msra.mxu0 %v34
    %378 = vmatpush.msra.mxu0 %v33
    %379 = vmatpush.msra.mxu0 %v32
    %380 = vmatpush.msra.mxu0 %v31
    %381 = vmatpush.msra.mxu0 %v30
    %382 = vmatpush.msra.mxu0 %v29
    %383 = vmatpush.msra.mxu0 %v28
    %384 = vmatpush.msra.mxu0 %v27
    %385 = vmatpush.msra.mxu0 %v26
    %386 = vmatpush.msra.mxu0 %v25
    %387 = vmatpush.msra.mxu0 %v24
    %388 = vmatpush.msra.mxu0 %v23
    %389 = vmatpush.msra.mxu0 %v22
    %390 = vmatmul.f32.gmra.mxu0 %v350
    %v391 = vpop.f32.mrf.mxu0
    %v392 = vadd.f32 %v372, %v391
    %393 = vdwg.mxu0
    %v394 = vtanh.pop %v392
    %395 = vset.pattern.permute.xlu0 7
    %396 = vperm.xlu0 %395, %v21
    %v397 = vpop.permute.xlu0 %396
    %vm398 = vcmp.eq.s32.totalorder %v43, %v397
    %v399 = vsel %vm398, 1, 0
    %v400 = vcvt.s32.f32 %v399
    %v402 = vsel %vm50, %v394, 0
    %404 = vmatpush.msra.mxu0 0.0
    %405 = vmatpush.msra.mxu0 0.0
    %406 = vmatpush.msra.mxu0 0.0
    %407 = vmatpush.msra.mxu0 0.0
    %408 = vmatpush.msra.mxu0 0.0
    %409 = vmatpush.msra.mxu0 0.0
    %410 = vmatpush.msra.mxu0 0.0
    %411 = vmatpush.msra.mxu0 0.0
    %412 = vmatpush.msra.mxu0 0.0
    %413 = vmatpush.msra.mxu0 0.0
    %414 = vmatpush.msra.mxu0 0.0
    %415 = vmatpush.msra.mxu0 0.0
    %416 = vmatpush.msra.mxu0 %v41
    %417 = vmatpush.msra.mxu0 %v40
    %418 = vmatpush.msra.mxu0 %v39
    %419 = vmatpush.msra.mxu0 %v38
    %420 = vmatmul.f32.gmra.mxu0 %v402
    %v421 = vpop.f32.mrf.mxu0
    %v422 = vadd.f32 0.0, %v421
    %423 = vdwg.mxu0
    %424 = vmatpush.msra.mxu0 %v37
    %425 = vmatpush.msra.mxu0 %v36
    %426 = vmatpush.msra.mxu0 %v35
    %427 = vmatpush.msra.mxu0 %v34
    %428 = vmatpush.msra.mxu0 %v33
    %429 = vmatpush.msra.mxu0 %v32
    %430 = vmatpush.msra.mxu0 %v31
    %431 = vmatpush.msra.mxu0 %v30
    %432 = vmatpush.msra.mxu0 %v29
    %433 = vmatpush.msra.mxu0 %v28
    %434 = vmatpush.msra.mxu0 %v27
    %435 = vmatpush.msra.mxu0 %v26
    %436 = vmatpush.msra.mxu0 %v25
    %437 = vmatpush.msra.mxu0 %v24
    %438 = vmatpush.msra.mxu0 %v23
    %439 = vmatpush.msra.mxu0 %v22
    %440 = vmatmul.f32.gmra.mxu0 %v400
    %v441 = vpop.f32.mrf.mxu0
    %v442 = vadd.f32 %v422, %v441
    %443 = vdwg.mxu0
    %v444 = vtanh.pop %v442
    %v445 = vld [vmem:[%s3] sm:$0xff]
    %v446 = vld [vmem:[%s3 + $0x8] sm:$0xff]
    %v447 = vld [vmem:[%s3 + $0x10] sm:$0xff]
    %v448 = vld [vmem:[%s3 + $0x18] sm:$0xff]
    %v449 = vld [vmem:[%s4] sm:$0x1]
    %v451 = vperm.slane %v449, 0
    %v454 = vsel %vm50, %v444, 0
    %456 = vmatpush.msra.mxu0 0.0
    %457 = vmatpush.msra.mxu0 0.0
    %458 = vmatpush.msra.mxu0 0.0
    %459 = vmatpush.msra.mxu0 0.0
    %460 = vmatpush.msra.mxu0 0.0
    %461 = vmatpush.msra.mxu0 0.0
    %462 = vmatpush.msra.mxu0 0.0
    %463 = vmatpush.msra.mxu0 0.0
    %464 = vmatpush.msra.mxu0 0.0
    %465 = vmatpush.msra.mxu0 0.0
    %466 = vmatpush.msra.mxu0 0.0
    %467 = vmatpush.msra.mxu0 0.0
    %468 = vmatpush.msra.mxu0 %v448
    %469 = vmatpush.msra.mxu0 %v447
    %470 = vmatpush.msra.mxu0 %v446
    %471 = vmatpush.msra.mxu0 %v445
    %472 = vmatmul.f32.gmra.mxu0 %v454
    %v473 = vpop.f32.mrf.mxu0
    %v474 = vadd.f32 %v451, %v473
    %475 = vdwg.mxu0
    %476 = vst [vmem:[#allocation2] sm:$0x3] %v474
    // Predicated region
    $region22: #{_forward_impl.1} parent=1 // pred_check
      _
    $region23: #{_forward_impl.1} parent=1 // pred_check_branch
      %478 = sbr.rel (0) target = $region25
    $region24: #{_forward_impl.1} parent=1 // pred_region
      %480 = vsyncadd [#allocation3], 0
      %s482 = sshll.u32 [#allocation2], 4
      %s483 = int_to_ptr.vmem [resolvable:$true] %s482
      %s484 = sshll.u32 %s5, 4
      %s485 = int_to_ptr.hbm [resolvable:$true] %s484
      %487 = dma.vmem_to_hbm [thread:$0]  %s483, 32, %s485, [#allocation3]
    $region25: #{_forward_impl.1} parent=1 // pred_fallthru
      _
    // Predicated region
    $region26: #{_forward_impl.1} parent=1 // pred_check
      _
    $region27: #{_forward_impl.1} parent=1 // pred_check_branch
      %489 = sbr.rel (0) target = $region29
    $region28: #{_forward_impl.1} parent=1 // pred_region
      %491 = dma.done [#allocation3], 32
    $region29: #{_forward_impl.1} parent=1 // pred_fallthru
      _
    %492 = vsyncpa [#allocation3], 1

</llo_original>
